<compile_context>
chip_gen: v5e
topology: v5e:2x2
jax: 0.10.0
libtpu: 0.0.40
codegen_flags: <defaults>
</compile_context>

<pallas_src>
import functools

import jax
import jax.numpy as jnp
from jax.experimental import pallas as pl
from jax.experimental.pallas import tpu as pltpu


def _ce_label_smooth_kernel(x_ref, t_ref, out_ref, *, num_classes, epsilon,
                            n_rows, tile_n):
    # x_ref: (TILE_N, C) logits block (native dtype); t_ref: (TILE_N, 1) int32.
    x = x_ref[...].astype(jnp.float32)                                  # (T, C)
    labels = t_ref[...]                                                 # (T, 1)

    # Numerically stable row-wise logsumexp.
    m = jnp.max(x, axis=1, keepdims=True)                               # (T, 1)
    lse = m + jnp.log(jnp.sum(jnp.exp(x - m), axis=1, keepdims=True))   # (T, 1)

    # Single fused weighted reduction:
    #   w[c] = eps/C + (1-eps) * [c == label]   (sums to 1 for in-range labels)
    #   loss = lse - sum_c w[c] * x[c]
    # Out-of-range labels would make w sum to eps only (torch's scatter_ would
    # error instead); callers must pass labels in [0, C).
    base = epsilon / num_classes                # compile-time constant
    peak = base + (1.0 - epsilon)
    col = jax.lax.broadcasted_iota(jnp.int32, x.shape, 1)               # (T, C)
    w = jnp.where(col == labels, peak, base)                            # (T, C)
    wx = jnp.sum(w * x, axis=1, keepdims=True)                          # (T, 1)

    row_loss = lse - wx                                                 # (T, 1)

    # Mask rows of the (possibly padded) last tile so undefined data never
    # reaches the partial sum (where-select also neutralizes NaN/Inf rows).
    row = jax.lax.broadcasted_iota(jnp.int32, (tile_n, 1), 0)
    valid = (pl.program_id(0) * tile_n + row) < n_rows
    row_loss = jnp.where(valid, row_loss, 0.0)

    # Per-tile partial sum -> single f32 per grid step.
    tile_sum = jnp.sum(row_loss, axis=0, keepdims=True)                 # (1, 1)
    out_ref[...] = tile_sum.reshape(1, 1, 1)


def _pick_tile_n(n, c, itemsize):
    """Dtype-aware batch tile.

    Keeps the streamed logits block around ~2 MiB, so with Pallas double
    buffering (~4 MiB) plus the in-kernel f32 cast / exp / weight temporaries
    (~3-4x the block in f32) the working set stays far below every
    generation's scoped-VMEM limit.  Also caps at cdiv(n, 2) so the grid has
    at least two steps (v7x megacore sharding of the "parallel" batch axis).
    """
    if n <= 8:
        return n
    budget_rows = (2 * 1024 * 1024) // max(1, itemsize * c)
    tile = min(n, budget_rows, 2048, pl.cdiv(n, 2))
    tile = max(8, (tile // 8) * 8)      # sublane-aligned when not the full axis
    return tile


def cross_entropy_label_smooth(inputs, targets, *, num_classes, epsilon=0.1,
                               tile_n=None):
    """Label-smoothed cross entropy, matching CrossEntropyLabelSmooth.forward.

    inputs: (N, C) float logits -- pass bf16 when available (kernel is
            HBM-bound; internal math is f32 regardless).
    targets: (N,) int labels in [0, C).
    Returns a scalar f32 loss ( == (-smoothed_onehot * log_softmax).mean(0).sum() ).
    """
    n, c = inputs.shape
    assert c == num_classes
    targets_2d = targets.astype(jnp.int32).reshape(n, 1)

    itemsize = jnp.dtype(inputs.dtype).itemsize
    if tile_n is None:
        tile_n = _pick_tile_n(n, c, itemsize)
    grid_n = pl.cdiv(n, tile_n)

    # Explicit VMEM limit: double-buffered inputs + f32/exp/weight temporaries
    # + slack, clamped to [16 MiB, 48 MiB] (>= v5e default, < v7x physical).
    est = (2 * tile_n * c * itemsize        # double-buffered logits blocks
           + 2 * tile_n * 4                 # double-buffered label blocks
           + 4 * tile_n * c * 4             # f32 cast + exp + weighted temporaries
           + (4 << 20))                     # headroom
    vmem_limit = int(min(max(est, 16 << 20), 48 << 20))

    kernel = functools.partial(
        _ce_label_smooth_kernel,
        num_classes=num_classes, epsilon=epsilon, n_rows=n, tile_n=tile_n,
    )

    partials = pl.pallas_call(
        kernel,
        out_shape=jax.ShapeDtypeStruct((grid_n, 1, 1), jnp.float32),
        grid=(grid_n,),
        in_specs=[
            pl.BlockSpec((tile_n, c), lambda i: (i, 0)),   # logits tile -> VMEM
            pl.BlockSpec((tile_n, 1), lambda i: (i, 0)),   # labels tile -> VMEM
        ],
        out_specs=pl.BlockSpec((1, 1, 1), lambda i: (i, 0, 0)),
        compiler_params=pltpu.CompilerParams(
            dimension_semantics=("parallel",),             # independent row tiles
            vmem_limit_bytes=vmem_limit,
        ),
    )(inputs, targets_2d)

    # Tiny (grid_n,) reduction + mean(0).sum() scaling done in the wrapper.
    return jnp.sum(partials) / n


def _reference(inputs, targets, num_classes, epsilon=0.1):
    log_probs = jax.nn.log_softmax(inputs.astype(jnp.float32), axis=1)
    one_hot = jax.nn.one_hot(targets, num_classes, dtype=jnp.float32)
    smoothed = (1.0 - epsilon) * one_hot + epsilon / num_classes
    return (-smoothed * log_probs).mean(0).sum()


if __name__ == "__main__":
    epsilon = 0.1
    key = jax.random.PRNGKey(0)

    # Case 1: small, single/dual-tile path, f32 logits.
    num_classes = 32
    batch = 8
    k_logits, k_labels, key = jax.random.split(key, 3)
    logits = jax.random.normal(k_logits, (batch, num_classes), dtype=jnp.float32)
    labels = jax.random.randint(k_labels, (batch,), 0, num_classes, dtype=jnp.int32)

    loss = cross_entropy_label_smooth(
        logits, labels, num_classes=num_classes, epsilon=epsilon
    )
    loss = jax.block_until_ready(loss)
    ref = _reference(logits, labels, num_classes, epsilon)
    assert jnp.allclose(loss, ref, atol=1e-5, rtol=1e-5), (loss, ref)

    # Case 2: multi-tile path with a padded last tile (forced tile_n).
    batch2 = 40
    k_logits2, k_labels2, key = jax.random.split(key, 3)
    logits2 = jax.random.normal(k_logits2, (batch2, num_classes), dtype=jnp.float32)
    labels2 = jax.random.randint(k_labels2, (batch2,), 0, num_classes, dtype=jnp.int32)

    loss2 = cross_entropy_label_smooth(
        logits2, labels2, num_classes=num_classes, epsilon=epsilon, tile_n=16
    )
    loss2 = jax.block_until_ready(loss2)
    ref2 = _reference(logits2, labels2, num_classes, epsilon)
    assert jnp.allclose(loss2, ref2, atol=1e-5, rtol=1e-5), (loss2, ref2)

    # Case 3: bf16 logits (halved HBM traffic path); math is f32 in-kernel.
    logits3 = logits2.astype(jnp.bfloat16)
    loss3 = cross_entropy_label_smooth(
        logits3, labels2, num_classes=num_classes, epsilon=epsilon
    )
    loss3 = jax.block_until_ready(loss3)
    ref3 = _reference(logits3.astype(jnp.float32), labels2, num_classes, epsilon)
    assert jnp.allclose(loss3, ref3, atol=1e-4, rtol=1e-4), (loss3, ref3)

    print("KERNEL_OK")
</pallas_src>

<mosaic_0001>
module attributes {stable_mosaic.version = 11 : i64} {
  func.func @_ce_label_smooth_kernel(%arg0: i32, %arg1: memref<8x32xf32, #tpu.memory_space<vmem>>, %arg2: memref<8x1xi32, #tpu.memory_space<vmem>>, %arg3: memref<1x1x1xf32, #tpu.memory_space<vmem>>) attributes {dimension_semantics = [#tpu.dimension_semantics<parallel>], iteration_bounds = array<i64: 1>, scalar_prefetch = 0 : i64, scratch_operands = 0 : i64, tpu.core_type = #tpu.core_type<tc>, window_params = [{transform_indices = @transform_0, window_bounds = array<i64: 8, 32>}, {transform_indices = @transform_1, window_bounds = array<i64: 8, 1>}, {transform_indices = @transform_2, window_bounds = array<i64: 1, 1, 1>}]} {
    %c0 = arith.constant 0 : index
    %c0_0 = arith.constant 0 : index
    %0 = vector.load %arg1[%c0, %c0_0] : memref<8x32xf32, #tpu.memory_space<vmem>>, vector<8x32xf32>
    %c0_1 = arith.constant 0 : index
    %c0_2 = arith.constant 0 : index
    %1 = vector.load %arg2[%c0_1, %c0_2] : memref<8x1xi32, #tpu.memory_space<vmem>>, vector<8x1xi32>
    %cst = arith.constant dense<0xFF800000> : vector<8xf32>
    %2 = vector.multi_reduction <maximumf>, %0, %cst [1] : vector<8x32xf32> to vector<8xf32>
    %3 = vector.shape_cast %2 : vector<8xf32> to vector<8x1xf32>
    %4 = vector.broadcast %3 : vector<8x1xf32> to vector<8x32xf32>
    %5 = arith.subf %0, %4 : vector<8x32xf32>
    %6 = math.exp %5 : vector<8x32xf32>
    %cst_3 = arith.constant dense<0.000000e+00> : vector<8xf32>
    %7 = vector.multi_reduction <add>, %6, %cst_3 [1] : vector<8x32xf32> to vector<8xf32>
    %8 = vector.shape_cast %7 : vector<8xf32> to vector<8x1xf32>
    %9 = math.log %8 : vector<8x1xf32>
    %10 = arith.addf %3, %9 : vector<8x1xf32>
    %11 = tpu.iota {dimensions = array<i32: 1>} : vector<8x32xi32>
    %12 = vector.broadcast %1 : vector<8x1xi32> to vector<8x32xi32>
    %13 = arith.cmpi eq, %11, %12 : vector<8x32xi32>
    %cst_4 = arith.constant 0.903124988 : f32
    %cst_5 = arith.constant 3.125000e-03 : f32
    %14 = vector.broadcast %cst_4 : f32 to vector<8x32xf32>
    %15 = vector.broadcast %cst_5 : f32 to vector<8x32xf32>
    %16 = arith.select %13, %14, %15 : vector<8x32xi1>, vector<8x32xf32>
    %17 = arith.mulf %16, %0 : vector<8x32xf32>
    %cst_6 = arith.constant dense<0.000000e+00> : vector<8xf32>
    %18 = vector.multi_reduction <add>, %17, %cst_6 [1] : vector<8x32xf32> to vector<8xf32>
    %19 = vector.shape_cast %18 : vector<8xf32> to vector<8x1xf32>
    %20 = arith.subf %10, %19 : vector<8x1xf32>
    %21 = tpu.iota {dimensions = array<i32: 0>} : vector<8x1xi32>
    %c8_i32 = arith.constant 8 : i32
    %22 = arith.muli %arg0, %c8_i32 : i32
    %23 = vector.broadcast %22 : i32 to vector<8x1xi32>
    %24 = arith.addi %23, %21 : vector<8x1xi32>
    %c8_i32_7 = arith.constant 8 : i32
    %25 = vector.broadcast %c8_i32_7 : i32 to vector<8x1xi32>
    %26 = arith.cmpi slt, %24, %25 : vector<8x1xi32>
    %cst_8 = arith.constant 0.000000e+00 : f32
    %27 = vector.broadcast %cst_8 : f32 to vector<8x1xf32>
    %28 = arith.select %26, %20, %27 : vector<8x1xi1>, vector<8x1xf32>
    %cst_9 = arith.constant dense<0.000000e+00> : vector<1xf32>
    %29 = vector.multi_reduction <add>, %28, %cst_9 [0] : vector<8x1xf32> to vector<1xf32>
    %30 = vector.shape_cast %29 : vector<1xf32> to vector<1x1xf32>
    %31 = vector.shape_cast %30 : vector<1x1xf32> to vector<1x1x1xf32>
    %c0_10 = arith.constant 0 : index
    %c0_11 = arith.constant 0 : index
    %c0_12 = arith.constant 0 : index
    %32 = vector.load %arg3[%c0_10, %c0_11, %c0_12] : memref<1x1x1xf32, #tpu.memory_space<vmem>>, vector<1x1x1xf32>
    tpu.vector_store %arg3[%c0_10, %c0_11, %c0_12], %31 {strides = array<i32>} : memref<1x1x1xf32, #tpu.memory_space<vmem>>, vector<1x1x1xf32>,
    return
  }
  func.func @transform_0(%arg0: i32) -> (i32, i32) {
    %c0_i32 = arith.constant 0 : i32
    %c0_i32_0 = arith.constant 0 : i32
    return %arg0, %c0_i32 : i32, i32
  }
  func.func @transform_1(%arg0: i32) -> (i32, i32) {
    %c0_i32 = arith.constant 0 : i32
    %c0_i32_0 = arith.constant 0 : i32
    return %arg0, %c0_i32 : i32, i32
  }
  func.func @transform_2(%arg0: i32) -> (i32, i32, i32) {
    %c0_i32 = arith.constant 0 : i32
    %c0_i32_0 = arith.constant 0 : i32
    %c0_i32_1 = arith.constant 0 : i32
    return %arg0, %c0_i32, %c0_i32_0 : i32, i32, i32
  }
}

</mosaic_0001>

<llo_original>
// kernel: tpu_custom_call.1
$region0: #{tpu_custom_call.1}
  #allocation0 [shape = 'u32[]', space=smem, size = 0x4, offset = 0x4, fixed_abs, tag = 'smem constant byte address 0x4 - core index']
  #allocation1 [shape = 'u32[72,128]{1,0:T(1,128)}', space=vmem, size = 0x9000, scoped, tag = 'internal scratch']
  %s0 = inlined_call_operand.vmem [shape: f32[8,32], index: 0, kind: input, shape index: {}]
  %s1 = inlined_call_operand.vmem [shape: s32[8,1], index: 1, kind: input, shape index: {}]
  %s2 = inlined_call_operand.hbm [shape: f32[1,1,1], index: 2, kind: output, shape index: {}]
  %s3 = sld [smem:[#allocation0]]
  $region18: #{tpu_custom_call.1} parent=0
    _
  %s5 = ssub.s32 1, %s3
  %s6 = scalar_select 0, %s5, %s3
  $region1: #{tpu_custom_call.1} parent=0
    #allocation2 [shape = 'u8[512]{0}', space=vmem, size = 0x400, scoped, tag = 'output window, operand 0, single buffered']
    #allocation3 [shape = 's32[1]{0}', space=sflag, size = 0x4, scoped, tag = 'scoped memory for tpu_custom_call.1']
    %7 = vsyncpa [#allocation3], 0
    // Predicated region
    $region2: #{tpu_custom_call.1} parent=1 // pred_check
      _
    $region3: #{tpu_custom_call.1} parent=1 // pred_check_branch
      %9 = sbr.rel (0) target = $region5
    $region4: #{tpu_custom_call.1} parent=1 // pred_region
      _
    $region5: #{tpu_custom_call.1} parent=1 // pred_fallthru
      _
    // Predicated region
    $region6: #{tpu_custom_call.1} parent=1 // pred_check
      _
    $region7: #{tpu_custom_call.1} parent=1 // pred_check_branch
      %11 = sbr.rel (0) target = $region9
    $region8: #{tpu_custom_call.1} parent=1 // pred_region
      _
    $region9: #{tpu_custom_call.1} parent=1 // pred_fallthru
      _
    %v12 = vld [vmem:[%s0] sm:$0xff]
    %v13 = vld [vmem:[%s1] sm:$0xff]
    %vm14 = vcmask 261120
    %v15 = vsel %vm14, %v12, -inf
    %16 = vmax.xlane.f32.xlu0 %v15
    %v17 = vpop.xlane.xlu0 %16
    %v18 = vsub.f32 %v12, %v17
    %v19 = vmul.f32 %v18, 1.442695
    %v20 = vpow.pop %v19
    %v21 = vsel %vm14, %v20, 0.0
    %22 = vadd.xlane.f32.xlu0 %v21
    %v23 = vpop.xlane.xlu0 %22
    %v24 = vlog2.pop %v23
    %v25 = vmul.f32 %v24, 0.6931472
    %v26 = vadd.f32 %v17, %v25
    %v27 = vlaneseq
    %v28 = vand.u32 %v27, 127
    %29 = vset.pattern.permute.xlu0 0
    %30 = vperm.xlu0 %29, %v13
    %v31 = vpop.permute.xlu0 %30
    %vm32 = vcmp.eq.s32.totalorder %v28, %v31
    %v33 = vsel %vm32, 0.903125, 0.003125
    %v34 = vmul.f32 %v33, %v12
    %v35 = vsel %vm14, %v34, 0.0
    %36 = vadd.xlane.f32.xlu0 %v35
    %v37 = vpop.xlane.xlu0 %36
    %v38 = vsub.f32 %v26, %v37
    %v39 = vlaneseq
    %v40 = vshrl.u32 %v39, 7
    %s41 = smul.u32 0, 8
    %v42 = vstv %s41
    %v43 = vadd.s32 %v42, %v40
    %vm44 = vcmp.lt.s32.totalorder %v43, 8
    %v45 = vsel %vm44, %v38, 0.0
    %v46 = vrot.slane %v45, 4
    %v47 = vadd.f32 %v45, %v46
    %v48 = vrot.slane %v47, 2
    %v49 = vadd.f32 %v47, %v48
    %v50 = vrot.slane %v49, 1
    %v51 = vadd.f32 %v49, %v50
    %vm52 = vcmask 0
    %53 = vst.msk [vmem:[#allocation2] sm:$0x1] %vm52, %v51
    // Predicated region
    $region10: #{tpu_custom_call.1} parent=1 // pred_check
      _
    $region11: #{tpu_custom_call.1} parent=1 // pred_check_branch
      %55 = sbr.rel (0) target = $region13
    $region12: #{tpu_custom_call.1} parent=1 // pred_region
      %57 = vsyncadd [#allocation3], 0
      %s59 = sshll.u32 [#allocation2], 4
      %s60 = int_to_ptr.vmem [resolvable:$true] %s59
      %s61 = sshll.u32 %s2, 4
      %s62 = int_to_ptr.hbm [resolvable:$true] %s61
      %64 = dma.vmem_to_hbm [thread:$0]  %s60, 16, %s62, [#allocation3]
    $region13: #{tpu_custom_call.1} parent=1 // pred_fallthru
      _
    // Predicated region
    $region14: #{tpu_custom_call.1} parent=1 // pred_check
      _
    $region15: #{tpu_custom_call.1} parent=1 // pred_check_branch
      %66 = sbr.rel (0) target = $region17
    $region16: #{tpu_custom_call.1} parent=1 // pred_region
      %68 = dma.done [#allocation3], 16
    $region17: #{tpu_custom_call.1} parent=1 // pred_fallthru
      _
    %69 = vsyncpa [#allocation3], 1

</llo_original>
